<compile_context>
chip_gen: v7x
topology: tpu7x:2x2x1
jax: 0.10.0
libtpu: 0.0.40
codegen_flags: <defaults>
</compile_context>

<pallas_src>
import functools

import numpy as np
import jax
import jax.numpy as jnp
from jax.experimental import pallas as pl
from jax.experimental.pallas import tpu as pltpu

LANE = 128
SUBLANE = 8
_SLAB_DTYPE = jnp.bfloat16            # dtype of the padded output slab (HBM writeback)
_SINGLE_BUFFER_PARAM_BYTES = 2 << 20  # single-buffer resident params above this size


def _round_up(x, m):
    return ((x + m - 1) // m) * m


_FINAL_ACTIVATIONS = {
    "sigmoid": jax.nn.sigmoid,
    "tanh": jnp.tanh,
    "relu": lambda z: jnp.maximum(z, 0.0),
    "softplus": jax.nn.softplus,
}


@functools.lru_cache(maxsize=1)
def _vmem_capacity_bytes():
    """Generation-aware VMEM capacity (128 MiB v5e/v6e, 64 MiB v7x)."""
    try:
        return int(pltpu.get_tpu_info().vmem_capacity_bytes)
    except Exception:
        return 64 * 2**20  # conservative (v7x-sized) fallback


# ---------------------------------------------------------------------------
# Kernel: fully fused MLP on one batch tile.
# ---------------------------------------------------------------------------
def _policy_mlp_kernel(*refs, n_layers, final_activation):
    """refs = (x_ref, w0, b0, ..., w_{L-1}, b_{L-1}, o_ref).

    L-1 Linear+ReLU layers then Linear+final_activation on one (tb, ...) batch
    tile.  Matmuls feed the MXU in the weights' dtype (bf16 by default) with
    f32 accumulation; bias add / activations run in f32 on the VPU/EUP.
    """
    x_ref = refs[0]
    o_ref = refs[-1]
    param_refs = refs[1:-1]

    cdt = param_refs[0].dtype             # MXU compute dtype (bf16 by default)
    h = x_ref[...].astype(cdt)
    for i in range(n_layers):
        w_ref = param_refs[2 * i]
        b_ref = param_refs[2 * i + 1]
        z = jnp.dot(h, w_ref[...], preferred_element_type=jnp.float32) + b_ref[...]
        if i < n_layers - 1:
            # Fuse the downcast into the ReLU: no co-resident f32 + bf16 copies of h.
            h = jnp.maximum(z, 0.0).astype(cdt)
        else:
            h = final_activation(z)       # final activation (default sigmoid), f32
    o_ref[...] = h.astype(o_ref.dtype)


# ---------------------------------------------------------------------------
# One-time parameter preparation (hoisted out of the per-call forward)
# ---------------------------------------------------------------------------
def prepare_policy_params(params, param_dtype=jnp.bfloat16):
    """Pad + cast the Policy parameters once (not on every forward call).

    params: list of (W, b) with W: (in, out)  [= PyTorch weight.T], b: (1, out).
    Hidden widths / action_dim are zero-padded to lane multiples of 128 so the
    matmuls and output store are lane-dense; padding rows/cols/lanes are zero,
    hence mathematically inert.  Pass param_dtype=jnp.float32 for exact parity
    with the f32 PyTorch reference (bf16 is MXU-native and the default).

    Returns (flat_params, dims, dims_p):
      flat_params : tuple (W0, b0, W1, b1, ...) of padded device arrays
      dims        : true layer widths   (state_dim, n0, ..., action_dim)
      dims_p      : lane-padded widths  (state_dim, 128*, ..., 128*)
    """
    dims = tuple([int(params[0][0].shape[0])] + [int(w.shape[1]) for (w, _) in params])
    dims_p = tuple([dims[0]] + [_round_up(d, LANE) for d in dims[1:]])
    flat = []
    for i, (w, b) in enumerate(params):
        d_in, d_out = w.shape
        d_in_p, d_out_p = dims_p[i], dims_p[i + 1]
        w_p = jnp.zeros((d_in_p, d_out_p), param_dtype).at[:d_in, :d_out].set(
            jnp.asarray(w, param_dtype))
        b_p = jnp.zeros((1, d_out_p), jnp.float32).at[:, :d_out].set(
            jnp.asarray(b, jnp.float32))
        flat += [w_p, b_p]
    return tuple(flat), dims, dims_p


# ---------------------------------------------------------------------------
# Forward pass (jitted)
# ---------------------------------------------------------------------------
@functools.partial(
    jax.jit,
    static_argnames=("dims", "dims_p", "final_activation", "batch_tile"),
)
def _policy_forward_impl(state, flat_params, *, dims, dims_p, final_activation,
                         batch_tile):
    act = _FINAL_ACTIVATIONS[final_activation]
    n_layers = len(dims) - 1
    batch, state_dim = state.shape
    action_dim = dims[-1]
    out_p = dims_p[-1]

    # ----- batch tiling: large tiles (per-step overhead dominates this workload);
    # when multi-tile, prefer an even tile count so both v7x TCs get equal work.
    tb = _round_up(min(int(batch_tile), _round_up(batch, SUBLANE)), SUBLANE)
    n_tiles = -(-batch // tb)
    if n_tiles > 1 and n_tiles % 2 == 1:
        n_tiles += 1
        tb = _round_up(-(-batch // n_tiles), SUBLANE)
        n_tiles = -(-batch // tb)
    batch_p = n_tiles * tb
    state_in = state
    if batch_p != batch:
        state_in = jnp.zeros((batch_p, state_dim), state.dtype).at[:batch].set(state)

    # ----- BlockSpecs: activations streamed over batch; params VMEM-resident via
    # constant index_maps.  Large resident params are single-buffered (halves
    # their VMEM footprint -- matters on v7x's 64 MiB VMEM); tiny nets keep the
    # default double-buffered path.
    param_bytes = sum(int(p.size) * p.dtype.itemsize for p in flat_params)
    single_buffer = param_bytes > _SINGLE_BUFFER_PARAM_BYTES
    in_specs = [pl.BlockSpec((tb, state_dim), lambda i: (i, 0))]
    for p in flat_params:
        if single_buffer:
            in_specs.append(pl.BlockSpec(tuple(p.shape), lambda i: (0, 0),
                                         pipeline_mode=pl.Buffered(1)))
        else:
            in_specs.append(pl.BlockSpec(tuple(p.shape), lambda i: (0, 0)))
    out_specs = pl.BlockSpec((tb, out_p), lambda i: (i, 0))

    # ----- VMEM budget: lane-padded input tile, buffering factors, intermediates.
    vmem_cap = _vmem_capacity_bytes()
    out_itemsize = jnp.dtype(_SLAB_DTYPE).itemsize
    in_lane = _round_up(state_dim, LANE)        # (tb, 4) tile is lane-padded in VMEM
    io_bytes = 2 * tb * in_lane * state.dtype.itemsize + 2 * tb * out_p * out_itemsize
    param_vmem = (1 if single_buffer else 2) * param_bytes
    max_w = max(dims_p)
    act_bytes = tb * max_w * (4 + 4 + 2)        # z(f32) + f32 temp + bf16 h per layer
    vmem_needed = io_bytes + param_vmem + act_bytes
    vmem_limit = int(min(max(2 * vmem_needed, 32 * 2**20), vmem_cap))
    # TODO(synk): if single-buffered params still exceed ~half of VMEM, fall back to
    # per-layer weight streaming (K/N tiling) instead of keeping them resident.

    # ----- advisory cost estimate from the TRUE (unpadded) dims ----------------------
    flops = 2 * batch * sum(dims[i] * dims[i + 1] for i in range(n_layers))
    transcendentals = batch * action_dim
    bytes_accessed = (int(state_in.size) * state_in.dtype.itemsize
                      + param_bytes
                      + batch_p * out_p * out_itemsize)

    kernel = functools.partial(
        _policy_mlp_kernel, n_layers=n_layers, final_activation=act
    )

    out_padded = pl.pallas_call(
        kernel,
        out_shape=jax.ShapeDtypeStruct((batch_p, out_p), _SLAB_DTYPE),
        grid=(n_tiles,),
        in_specs=in_specs,
        out_specs=out_specs,
        compiler_params=pltpu.CompilerParams(
            dimension_semantics=("parallel",),   # split batch tiles across TCs (v7x)
            vmem_limit_bytes=vmem_limit,
        ),
        cost_estimate=pl.CostEstimate(
            flops=flops,
            transcendentals=transcendentals,
            bytes_accessed=bytes_accessed,
        ),
    )(state_in, *flat_params)

    # strip batch padding and the lane-padding of the width-1 action output;
    # return f32 like the PyTorch module (tiny (batch, action_dim) cast).
    return out_padded[:batch, :action_dim].astype(jnp.float32)


def policy_forward(state, prepared, final_activation="sigmoid", *, batch_tile=512):
    """Run the Policy MLP forward pass as a single batch-tiled Pallas TPU kernel.

    state:    (batch, state_dim) float32 (or bfloat16)
    prepared: output of prepare_policy_params(params) -- padded/cast once at init.
    """
    if final_activation not in _FINAL_ACTIVATIONS:
        raise ValueError(f"final_activation {final_activation} function not availible")
    flat_params, dims, dims_p = prepared
    return _policy_forward_impl(state, flat_params, dims=dims, dims_p=dims_p,
                                final_activation=final_activation,
                                batch_tile=int(batch_tile))


# ---------------------------------------------------------------------------
# Parameter init + pure-JAX reference
# ---------------------------------------------------------------------------
def init_policy_params(key, state_dim, action_dim, Nneurons):
    """Deterministic parameter init matching the PyTorch module's layer shapes.

    Layer i of nn.Linear(in, out) -> here W: (in, out), b: (1, out).
    """
    dims = [state_dim] + list(Nneurons) + [action_dim]
    params = []
    for i in range(len(dims) - 1):
        fan_in, fan_out = dims[i], dims[i + 1]
        key, wk, bk = jax.random.split(key, 3)
        bound = 1.0 / np.sqrt(fan_in)  # same scale as PyTorch's default Linear init
        w = jax.random.uniform(wk, (fan_in, fan_out), jnp.float32, -bound, bound)
        b = jax.random.uniform(bk, (1, fan_out), jnp.float32, -bound, bound)
        params.append((w, b))
    return params


def _reference_forward(state, params, final_activation="sigmoid"):
    """Pure-JAX f32 reference of the same forward pass."""
    act = _FINAL_ACTIVATIONS[final_activation]
    h = state
    for i, (w, b) in enumerate(params):
        z = h @ w + b
        h = jnp.maximum(z, 0.0) if i < len(params) - 1 else act(z)
    return h


# ---------------------------------------------------------------------------
# Main
# ---------------------------------------------------------------------------
if __name__ == "__main__":
    key = jax.random.PRNGKey(0)

    # Small shapes consistent with the Policy module.
    batch = 8
    state_dim = 4
    Nneurons = np.array([32, 32])
    action_dim = 1

    key, sk = jax.random.split(key)
    state = jax.random.normal(sk, (batch, state_dim), dtype=jnp.float32)
    params = init_policy_params(key, state_dim, action_dim, Nneurons)

    # One-time pad + bf16 cast (hoisted out of the forward path).
    prepared = prepare_policy_params(params)

    # --- single-tile case (batch=8) ---
    out = jax.block_until_ready(policy_forward(state, prepared, "sigmoid"))
    ref = jax.block_until_ready(_reference_forward(state, params))

    assert out.shape == (batch, action_dim)
    assert bool(jnp.all(jnp.isfinite(out)))
    # bf16 weights/output slab with f32 accumulation vs. full-f32 reference.
    assert bool(jnp.max(jnp.abs(out - ref)) < 2e-2)

    # --- multi-tile case (exercises batch padding + the even-tile megacore path) ---
    key, sk2 = jax.random.split(key)
    big_batch = 1000  # not a multiple of the tile or of 8 -> exercises padding
    state_big = jax.random.normal(sk2, (big_batch, state_dim), dtype=jnp.float32)
    out_big = jax.block_until_ready(policy_forward(state_big, prepared, "sigmoid"))
    ref_big = jax.block_until_ready(_reference_forward(state_big, params))

    assert out_big.shape == (big_batch, action_dim)
    assert bool(jnp.all(jnp.isfinite(out_big)))
    assert bool(jnp.max(jnp.abs(out_big - ref_big)) < 2e-2)

    print("KERNEL_OK")
</pallas_src>

<mosaic_0001>
module attributes {stable_mosaic.version = 11 : i64} {
  func.func @_policy_mlp_kernel(%arg0: i32, %arg1: memref<8x4xf32, #tpu.memory_space<vmem>>, %arg2: memref<4x128xbf16, #tpu.memory_space<vmem>>, %arg3: memref<1x128xf32, #tpu.memory_space<vmem>>, %arg4: memref<128x128xbf16, #tpu.memory_space<vmem>>, %arg5: memref<1x128xf32, #tpu.memory_space<vmem>>, %arg6: memref<128x128xbf16, #tpu.memory_space<vmem>>, %arg7: memref<1x128xf32, #tpu.memory_space<vmem>>, %arg8: memref<8x128xbf16, #tpu.memory_space<vmem>>) attributes {dimension_semantics = [#tpu.dimension_semantics<parallel>], iteration_bounds = array<i64: 1>, scalar_prefetch = 0 : i64, scratch_operands = 0 : i64, tpu.core_type = #tpu.core_type<tc>, window_params = [{transform_indices = @transform_0, window_bounds = array<i64: 8, 4>}, {pipeline_mode = #tpu.pipeline_mode<synchronous>, transform_indices = @transform_1, window_bounds = array<i64: 4, 128>}, {pipeline_mode = #tpu.pipeline_mode<synchronous>, transform_indices = @transform_2, window_bounds = array<i64: 1, 128>}, {pipeline_mode = #tpu.pipeline_mode<synchronous>, transform_indices = @transform_3, window_bounds = array<i64: 128, 128>}, {pipeline_mode = #tpu.pipeline_mode<synchronous>, transform_indices = @transform_4, window_bounds = array<i64: 1, 128>}, {pipeline_mode = #tpu.pipeline_mode<synchronous>, transform_indices = @transform_5, window_bounds = array<i64: 128, 128>}, {pipeline_mode = #tpu.pipeline_mode<synchronous>, transform_indices = @transform_6, window_bounds = array<i64: 1, 128>}, {transform_indices = @transform_7, window_bounds = array<i64: 8, 128>}]} {
    %c0 = arith.constant 0 : index
    %c0_0 = arith.constant 0 : index
    %0 = vector.load %arg1[%c0, %c0_0] : memref<8x4xf32, #tpu.memory_space<vmem>>, vector<8x4xf32>
    %1 = arith.truncf %0 : vector<8x4xf32> to vector<8x4xbf16>
    %c0_1 = arith.constant 0 : index
    %c0_2 = arith.constant 0 : index
    %2 = vector.load %arg2[%c0_1, %c0_2] : memref<4x128xbf16, #tpu.memory_space<vmem>>, vector<4x128xbf16>
    %cst = arith.constant dense<0.000000e+00> : vector<8x128xf32>
    %3 = tpu.matmul %1, %2, %cst {dimension_numbers = #tpu.dot_dimension_numbers<[1], [0], [0], [1], [0, 0, 1, 1], [], []>} : vector<8x4xbf16>, vector<4x128xbf16>, vector<8x128xf32> -> vector<8x128xf32>
    %c0_3 = arith.constant 0 : index
    %c0_4 = arith.constant 0 : index
    %4 = vector.load %arg3[%c0_3, %c0_4] : memref<1x128xf32, #tpu.memory_space<vmem>>, vector<1x128xf32>
    %5 = vector.broadcast %4 : vector<1x128xf32> to vector<8x128xf32>
    %6 = arith.addf %3, %5 : vector<8x128xf32>
    %cst_5 = arith.constant 0.000000e+00 : f32
    %7 = vector.broadcast %cst_5 : f32 to vector<8x128xf32>
    %8 = arith.maximumf %6, %7 : vector<8x128xf32>
    %9 = arith.truncf %8 : vector<8x128xf32> to vector<8x128xbf16>
    %c0_6 = arith.constant 0 : index
    %c0_7 = arith.constant 0 : index
    %10 = vector.load %arg4[%c0_6, %c0_7] : memref<128x128xbf16, #tpu.memory_space<vmem>>, vector<128x128xbf16>
    %cst_8 = arith.constant dense<0.000000e+00> : vector<8x128xf32>
    %11 = tpu.matmul %9, %10, %cst_8 {dimension_numbers = #tpu.dot_dimension_numbers<[1], [0], [0], [1], [0, 0, 1, 1], [], []>} : vector<8x128xbf16>, vector<128x128xbf16>, vector<8x128xf32> -> vector<8x128xf32>
    %c0_9 = arith.constant 0 : index
    %c0_10 = arith.constant 0 : index
    %12 = vector.load %arg5[%c0_9, %c0_10] : memref<1x128xf32, #tpu.memory_space<vmem>>, vector<1x128xf32>
    %13 = vector.broadcast %12 : vector<1x128xf32> to vector<8x128xf32>
    %14 = arith.addf %11, %13 : vector<8x128xf32>
    %cst_11 = arith.constant 0.000000e+00 : f32
    %15 = vector.broadcast %cst_11 : f32 to vector<8x128xf32>
    %16 = arith.maximumf %14, %15 : vector<8x128xf32>
    %17 = arith.truncf %16 : vector<8x128xf32> to vector<8x128xbf16>
    %c0_12 = arith.constant 0 : index
    %c0_13 = arith.constant 0 : index
    %18 = vector.load %arg6[%c0_12, %c0_13] : memref<128x128xbf16, #tpu.memory_space<vmem>>, vector<128x128xbf16>
    %cst_14 = arith.constant dense<0.000000e+00> : vector<8x128xf32>
    %19 = tpu.matmul %17, %18, %cst_14 {dimension_numbers = #tpu.dot_dimension_numbers<[1], [0], [0], [1], [0, 0, 1, 1], [], []>} : vector<8x128xbf16>, vector<128x128xbf16>, vector<8x128xf32> -> vector<8x128xf32>
    %c0_15 = arith.constant 0 : index
    %c0_16 = arith.constant 0 : index
    %20 = vector.load %arg7[%c0_15, %c0_16] : memref<1x128xf32, #tpu.memory_space<vmem>>, vector<1x128xf32>
    %21 = vector.broadcast %20 : vector<1x128xf32> to vector<8x128xf32>
    %22 = arith.addf %19, %21 : vector<8x128xf32>
    %23 = arith.negf %22 : vector<8x128xf32>
    %24 = math.exp %23 : vector<8x128xf32>
    %cst_17 = arith.constant 1.000000e+00 : f32
    %25 = vector.broadcast %cst_17 : f32 to vector<8x128xf32>
    %26 = arith.addf %25, %24 : vector<8x128xf32>
    %27 = arith.divf %25, %26 : vector<8x128xf32>
    %28 = arith.truncf %27 : vector<8x128xf32> to vector<8x128xbf16>
    %c0_18 = arith.constant 0 : index
    %c0_19 = arith.constant 0 : index
    %29 = vector.load %arg8[%c0_18, %c0_19] : memref<8x128xbf16, #tpu.memory_space<vmem>>, vector<8x128xbf16>
    tpu.vector_store %arg8[%c0_18, %c0_19], %28 {strides = array<i32>} : memref<8x128xbf16, #tpu.memory_space<vmem>>, vector<8x128xbf16>,
    return
  }
  func.func @transform_0(%arg0: i32) -> (i32, i32) {
    %c0_i32 = arith.constant 0 : i32
    %c0_i32_0 = arith.constant 0 : i32
    return %arg0, %c0_i32 : i32, i32
  }
  func.func @transform_1(%arg0: i32) -> (i32, i32) {
    %c0_i32 = arith.constant 0 : i32
    %c0_i32_0 = arith.constant 0 : i32
    %c0_i32_1 = arith.constant 0 : i32
    return %c0_i32, %c0_i32_0 : i32, i32
  }
  func.func @transform_2(%arg0: i32) -> (i32, i32) {
    %c0_i32 = arith.constant 0 : i32
    %c0_i32_0 = arith.constant 0 : i32
    %c0_i32_1 = arith.constant 0 : i32
    return %c0_i32, %c0_i32_0 : i32, i32
  }
  func.func @transform_3(%arg0: i32) -> (i32, i32) {
    %c0_i32 = arith.constant 0 : i32
    %c0_i32_0 = arith.constant 0 : i32
    %c0_i32_1 = arith.constant 0 : i32
    return %c0_i32, %c0_i32_0 : i32, i32
  }
  func.func @transform_4(%arg0: i32) -> (i32, i32) {
    %c0_i32 = arith.constant 0 : i32
    %c0_i32_0 = arith.constant 0 : i32
    %c0_i32_1 = arith.constant 0 : i32
    return %c0_i32, %c0_i32_0 : i32, i32
  }
  func.func @transform_5(%arg0: i32) -> (i32, i32) {
    %c0_i32 = arith.constant 0 : i32
    %c0_i32_0 = arith.constant 0 : i32
    %c0_i32_1 = arith.constant 0 : i32
    return %c0_i32, %c0_i32_0 : i32, i32
  }
  func.func @transform_6(%arg0: i32) -> (i32, i32) {
    %c0_i32 = arith.constant 0 : i32
    %c0_i32_0 = arith.constant 0 : i32
    %c0_i32_1 = arith.constant 0 : i32
    return %c0_i32, %c0_i32_0 : i32, i32
  }
  func.func @transform_7(%arg0: i32) -> (i32, i32) {
    %c0_i32 = arith.constant 0 : i32
    %c0_i32_0 = arith.constant 0 : i32
    return %arg0, %c0_i32 : i32, i32
  }
}

</mosaic_0001>

<llo_original>
// kernel: _policy_forward_impl.1
$region0: #{_policy_forward_impl.1}
  #allocation0 [shape = 'u32[]', space=smem, size = 0x4, offset = 0x4, fixed_abs, tag = 'smem constant byte address 0x4 - core index']
  #allocation1 [shape = 'u32[144,128]{1,0:T(1,128)}', space=vmem, size = 0x12000, scoped, tag = 'internal scratch']
  %s0 = inlined_call_operand.vmem [shape: f32[8,4], index: 0, kind: input, shape index: {}]
  %s1 = inlined_call_operand.vmem [shape: bf16[4,128], index: 1, kind: input, shape index: {}]
  %s2 = inlined_call_operand.vmem [shape: f32[1,128], index: 2, kind: input, shape index: {}]
  %s3 = inlined_call_operand.hbm [shape: bf16[128,128], index: 3, kind: input, shape index: {}]
  %s4 = inlined_call_operand.vmem [shape: f32[1,128], index: 4, kind: input, shape index: {}]
  %s5 = inlined_call_operand.hbm [shape: bf16[128,128], index: 5, kind: input, shape index: {}]
  %s6 = inlined_call_operand.vmem [shape: f32[1,128], index: 6, kind: input, shape index: {}]
  %s7 = inlined_call_operand.vmem [shape: bf16[8,128], index: 7, kind: output, shape index: {}]
  %s8 = sld [smem:[#allocation0]]
  $region46: #{_policy_forward_impl.1} parent=0
    _
  %s10 = ssub.s32 1, %s8
  %s11 = scalar_select 0, %s10, %s8
  $region1: #{_policy_forward_impl.1} parent=0
    #allocation2 [shape = 'u8[32768]{0}', space=vmem, size = 0x8000, scoped, tag = 'input window, operand 3, single buffered']
    #allocation3 [shape = 's32[1]{0}', space=sflag, size = 0x4, scoped, tag = 'scoped memory for _policy_forward_impl.1']
    #allocation4 [shape = 'u8[32768]{0}', space=vmem, size = 0x8000, scoped, tag = 'input window, operand 5, single buffered']
    #allocation5 [shape = 's32[1]{0}', space=sflag, size = 0x4, scoped, tag = 'scoped memory for _policy_forward_impl.1']
    %12 = vsyncpa [#allocation3], 0
    %13 = vsyncpa [#allocation5], 0
    // Predicated region
    $region2: #{_policy_forward_impl.1} parent=1 // pred_check
      _
    $region3: #{_policy_forward_impl.1} parent=1 // pred_check_branch
      %15 = sbr.rel (0) target = $region5
    $region4: #{_policy_forward_impl.1} parent=1 // pred_region
      _
    $region5: #{_policy_forward_impl.1} parent=1 // pred_fallthru
      _
    // Predicated region
    $region6: #{_policy_forward_impl.1} parent=1 // pred_check
      _
    $region7: #{_policy_forward_impl.1} parent=1 // pred_check_branch
      %17 = sbr.rel (0) target = $region9
    $region8: #{_policy_forward_impl.1} parent=1 // pred_region
      _
    $region9: #{_policy_forward_impl.1} parent=1 // pred_fallthru
      _
    // Predicated region
    $region10: #{_policy_forward_impl.1} parent=1 // pred_check
      _
    $region11: #{_policy_forward_impl.1} parent=1 // pred_check_branch
      %19 = sbr.rel (0) target = $region13
    $region12: #{_policy_forward_impl.1} parent=1 // pred_region
      _
    $region13: #{_policy_forward_impl.1} parent=1 // pred_fallthru
      _
    // Predicated region
    $region14: #{_policy_forward_impl.1} parent=1 // pred_check
      _
    $region15: #{_policy_forward_impl.1} parent=1 // pred_check_branch
      %21 = sbr.rel (0) target = $region17
    $region16: #{_policy_forward_impl.1} parent=1 // pred_region
      %s23 = ssub.s32 1024, 1024
      %24 = vsyncadd [#allocation3], %s23
      %s25 = sshll.u32 [#allocation2], 4
      %s26 = int_to_ptr.vmem [resolvable:$true] %s25
      %31 = dma.hbm_to_vmem [thread:$0]  %s3, 1024, %s26, [#allocation3], 64, 64, 4
    $region17: #{_policy_forward_impl.1} parent=1 // pred_fallthru
      _
    // Predicated region
    $region18: #{_policy_forward_impl.1} parent=1 // pred_check
      _
    $region19: #{_policy_forward_impl.1} parent=1 // pred_check_branch
      %33 = sbr.rel (0) target = $region21
    $region20: #{_policy_forward_impl.1} parent=1 // pred_region
      _
    $region21: #{_policy_forward_impl.1} parent=1 // pred_fallthru
      _
    // Predicated region
    $region22: #{_policy_forward_impl.1} parent=1 // pred_check
      _
    $region23: #{_policy_forward_impl.1} parent=1 // pred_check_branch
      %35 = sbr.rel (0) target = $region25
    $region24: #{_policy_forward_impl.1} parent=1 // pred_region
      %s37 = ssub.s32 1024, 1024
      %38 = vsyncadd [#allocation5], %s37
      %s39 = sshll.u32 [#allocation4], 4
      %s40 = int_to_ptr.vmem [resolvable:$true] %s39
      %45 = dma.hbm_to_vmem [thread:$0]  %s5, 1024, %s40, [#allocation5], 64, 64, 4
    $region25: #{_policy_forward_impl.1} parent=1 // pred_fallthru
      _
    // Predicated region
    $region26: #{_policy_forward_impl.1} parent=1 // pred_check
      _
    $region27: #{_policy_forward_impl.1} parent=1 // pred_check_branch
      %47 = sbr.rel (0) target = $region29
    $region28: #{_policy_forward_impl.1} parent=1 // pred_region
      _
    $region29: #{_policy_forward_impl.1} parent=1 // pred_fallthru
      _
    // Predicated region
    $region30: #{_policy_forward_impl.1} parent=1 // pred_check
      _
    $region31: #{_policy_forward_impl.1} parent=1 // pred_check_branch
      %49 = sbr.rel (0) target = $region33
    $region32: #{_policy_forward_impl.1} parent=1 // pred_region
      %50 = dma.done [#allocation3], 1024
    $region33: #{_policy_forward_impl.1} parent=1 // pred_fallthru
      _
    // Predicated region
    $region34: #{_policy_forward_impl.1} parent=1 // pred_check
      _
    $region35: #{_policy_forward_impl.1} parent=1 // pred_check_branch
      %52 = sbr.rel (0) target = $region37
    $region36: #{_policy_forward_impl.1} parent=1 // pred_region
      %53 = dma.done [#allocation5], 1024
    $region37: #{_policy_forward_impl.1} parent=1 // pred_fallthru
      _
    %v55 = vld [vmem:[%s0] sm:$0xff]
    %v56 = vpack.c.bf16 %v55, %v55
    %v57 = vld [vmem:[%s1] sm:$0x3]
    %v58 = vld [vmem:[%s2] sm:$0x1]
    %v60 = vlaneseq
    %v61 = vshrl.u32 %v60, 7
    %v62 = vsub.s32 0, %v61
    %v63 = vrot.slane %v58, %v62
    %vm65 = vcmask 31744
    %v67 = vsel %vm65, %v56, 0
    %vm69 = vcmask 1041408
    %v71 = vsel %vm69, %v57, 0
    %73 = vmatprep.subr.bf16.mxu0 0
    %74 = vmatpush1.bf16.msra.mxu0 %v71
    %75 = vmatprep.subr.bf16.mxu0 0
    %76 = vmatpush1.bf16.msra.mxu0 0
    %77 = vmatprep.subr.bf16.mxu0 0
    %78 = vmatpush1.bf16.msra.mxu0 0
    %79 = vmatprep.subr.bf16.mxu0 0
    %80 = vmatpush1.bf16.msra.mxu0 0
    %81 = vmatprep.subr.bf16.mxu0 0
    %82 = vmatpush1.bf16.msra.mxu0 0
    %83 = vmatprep.subr.bf16.mxu0 0
    %84 = vmatpush1.bf16.msra.mxu0 0
    %85 = vmatprep.subr.bf16.mxu0 0
    %86 = vmatpush1.bf16.msra.mxu0 0
    %87 = vmatprep.subr.bf16.mxu0 0
    %88 = vmatpush1.bf16.msra.mxu0 0
    %89 = vmatprep.subr.bf16.mxu0 0
    %90 = vmatpush1.bf16.msra.mxu0 0
    %91 = vmatprep.subr.bf16.mxu0 0
    %92 = vmatpush1.bf16.msra.mxu0 0
    %93 = vmatprep.subr.bf16.mxu0 0
    %94 = vmatpush1.bf16.msra.mxu0 0
    %95 = vmatprep.subr.bf16.mxu0 0
    %96 = vmatpush1.bf16.msra.mxu0 0
    %97 = vmatprep.subr.bf16.mxu0 0
    %98 = vmatpush1.bf16.msra.mxu0 0
    %99 = vmatprep.subr.bf16.mxu0 0
    %100 = vmatpush1.bf16.msra.mxu0 0
    %101 = vmatprep.subr.bf16.mxu0 0
    %102 = vmatpush1.bf16.msra.mxu0 0
    %103 = vmatprep.subr.bf16.mxu0 0
    %104 = vmatpush1.bf16.msra.mxu0 0
    %105 = vmatprep.mubr.bf16.mxu0 0
    %106 = vmatmul.mubr.bf16.gmra.mrb[0].mxu0 %v67
    %v107 = vpop.f32.mrb[0].mxu0
    %v108 = vadd.f32 %v63, %v107
    %v109 = vpop.f32.mrb[0].mxu0
    %v110 = vpop.f32.mrb[0].mxu0
    %v111 = vpop.f32.mrb[0].mxu0
    %112 = vdwg.mxu0
    %v113 = vmax.f32 %v108, 0.0
    %v114 = vpack.c.bf16 %v113, %v113
    %v115 = vld [vmem:[#allocation2] sm:$0xf]
    %v116 = vld [vmem:[#allocation2 + $0x4] sm:$0xf]
    %v117 = vld [vmem:[#allocation2 + $0x8] sm:$0xf]
    %v118 = vld [vmem:[#allocation2 + $0xc] sm:$0xf]
    %v119 = vld [vmem:[#allocation2 + $0x10] sm:$0xf]
    %v120 = vld [vmem:[#allocation2 + $0x14] sm:$0xf]
    %v121 = vld [vmem:[#allocation2 + $0x18] sm:$0xf]
    %v122 = vld [vmem:[#allocation2 + $0x1c] sm:$0xf]
    %v123 = vld [vmem:[#allocation2 + $0x20] sm:$0xf]
    %v124 = vld [vmem:[#allocation2 + $0x24] sm:$0xf]
    %v125 = vld [vmem:[#allocation2 + $0x28] sm:$0xf]
    %v126 = vld [vmem:[#allocation2 + $0x2c] sm:$0xf]
    %v127 = vld [vmem:[#allocation2 + $0x30] sm:$0xf]
    %v128 = vld [vmem:[#allocation2 + $0x34] sm:$0xf]
    %v129 = vld [vmem:[#allocation2 + $0x38] sm:$0xf]
    %v130 = vld [vmem:[#allocation2 + $0x3c] sm:$0xf]
    %v131 = vld [vmem:[%s4] sm:$0x1]
    %v133 = vlaneseq
    %v134 = vshrl.u32 %v133, 7
    %v135 = vsub.s32 0, %v134
    %v136 = vrot.slane %v131, %v135
    %v154 = vunpack.c.l.b16 %v115
    %v155 = vunpack.c.l.b16 %v116
    %v156 = vunpack.c.l.b16 %v117
    %v157 = vunpack.c.l.b16 %v118
    %v158 = vunpack.c.l.b16 %v119
    %v159 = vunpack.c.l.b16 %v120
    %v160 = vunpack.c.l.b16 %v121
    %v161 = vunpack.c.l.b16 %v122
    %v162 = vunpack.c.l.b16 %v123
    %v163 = vunpack.c.l.b16 %v124
    %v164 = vunpack.c.l.b16 %v125
    %v165 = vunpack.c.l.b16 %v126
    %v166 = vunpack.c.l.b16 %v127
    %v167 = vunpack.c.l.b16 %v128
    %v168 = vunpack.c.l.b16 %v129
    %v169 = vunpack.c.l.b16 %v130
    %v170 = vpack.c.b16 %v155, %v154
    %v171 = vpack.c.b16 %v157, %v156
    %v172 = vpack.c.b16 %v159, %v158
    %v173 = vpack.c.b16 %v161, %v160
    %v174 = vpack.c.b16 %v163, %v162
    %v175 = vpack.c.b16 %v165, %v164
    %v176 = vpack.c.b16 %v167, %v166
    %v177 = vpack.c.b16 %v169, %v168
    %186 = vmatprep.subr.bf16.mxu0 0
    %187 = vmatpush1.bf16.msra.mxu0 %v170
    %188 = vmatprep.subr.bf16.mxu0 0
    %189 = vmatpush1.bf16.msra.mxu0 %v171
    %190 = vmatprep.subr.bf16.mxu0 0
    %191 = vmatpush1.bf16.msra.mxu0 %v172
    %192 = vmatprep.subr.bf16.mxu0 0
    %193 = vmatpush1.bf16.msra.mxu0 %v173
    %194 = vmatprep.subr.bf16.mxu0 0
    %195 = vmatpush1.bf16.msra.mxu0 %v174
    %196 = vmatprep.subr.bf16.mxu0 0
    %197 = vmatpush1.bf16.msra.mxu0 %v175
    %198 = vmatprep.subr.bf16.mxu0 0
    %199 = vmatpush1.bf16.msra.mxu0 %v176
    %200 = vmatprep.subr.bf16.mxu0 0
    %201 = vmatpush1.bf16.msra.mxu0 %v177
    %202 = vmatprep.subr.bf16.mxu0 0
    %203 = vmatpush1.bf16.msra.mxu0 0
    %204 = vmatprep.subr.bf16.mxu0 0
    %205 = vmatpush1.bf16.msra.mxu0 0
    %206 = vmatprep.subr.bf16.mxu0 0
    %207 = vmatpush1.bf16.msra.mxu0 0
    %208 = vmatprep.subr.bf16.mxu0 0
    %209 = vmatpush1.bf16.msra.mxu0 0
    %210 = vmatprep.subr.bf16.mxu0 0
    %211 = vmatpush1.bf16.msra.mxu0 0
    %212 = vmatprep.subr.bf16.mxu0 0
    %213 = vmatpush1.bf16.msra.mxu0 0
    %214 = vmatprep.subr.bf16.mxu0 0
    %215 = vmatpush1.bf16.msra.mxu0 0
    %216 = vmatprep.subr.bf16.mxu0 0
    %217 = vmatpush1.bf16.msra.mxu0 0
    %218 = vmatprep.mubr.bf16.mxu0 0
    %219 = vmatmul.mubr.bf16.gmra.mrb[0].mxu0 %v114
    %v220 = vpop.f32.mrb[0].mxu0
    %v221 = vadd.f32 %v136, %v220
    %v222 = vpop.f32.mrb[0].mxu0
    %v223 = vpop.f32.mrb[0].mxu0
    %v224 = vpop.f32.mrb[0].mxu0
    %225 = vdwg.mxu0
    %v226 = vmax.f32 %v221, 0.0
    %v227 = vpack.c.bf16 %v226, %v226
    %v228 = vld [vmem:[#allocation4] sm:$0xf]
    %v229 = vld [vmem:[#allocation4 + $0x4] sm:$0xf]
    %v230 = vld [vmem:[#allocation4 + $0x8] sm:$0xf]
    %v231 = vld [vmem:[#allocation4 + $0xc] sm:$0xf]
    %v232 = vld [vmem:[#allocation4 + $0x10] sm:$0xf]
    %v233 = vld [vmem:[#allocation4 + $0x14] sm:$0xf]
    %v234 = vld [vmem:[#allocation4 + $0x18] sm:$0xf]
    %v235 = vld [vmem:[#allocation4 + $0x1c] sm:$0xf]
    %v236 = vld [vmem:[#allocation4 + $0x20] sm:$0xf]
    %v237 = vld [vmem:[#allocation4 + $0x24] sm:$0xf]
    %v238 = vld [vmem:[#allocation4 + $0x28] sm:$0xf]
    %v239 = vld [vmem:[#allocation4 + $0x2c] sm:$0xf]
    %v240 = vld [vmem:[#allocation4 + $0x30] sm:$0xf]
    %v241 = vld [vmem:[#allocation4 + $0x34] sm:$0xf]
    %v242 = vld [vmem:[#allocation4 + $0x38] sm:$0xf]
    %v243 = vld [vmem:[#allocation4 + $0x3c] sm:$0xf]
    %v244 = vld [vmem:[%s6] sm:$0x1]
    %v246 = vlaneseq
    %v247 = vshrl.u32 %v246, 7
    %v248 = vsub.s32 0, %v247
    %v249 = vrot.slane %v244, %v248
    %v267 = vunpack.c.l.b16 %v228
    %v268 = vunpack.c.l.b16 %v229
    %v269 = vunpack.c.l.b16 %v230
    %v270 = vunpack.c.l.b16 %v231
    %v271 = vunpack.c.l.b16 %v232
    %v272 = vunpack.c.l.b16 %v233
    %v273 = vunpack.c.l.b16 %v234
    %v274 = vunpack.c.l.b16 %v235
    %v275 = vunpack.c.l.b16 %v236
    %v276 = vunpack.c.l.b16 %v237
    %v277 = vunpack.c.l.b16 %v238
    %v278 = vunpack.c.l.b16 %v239
    %v279 = vunpack.c.l.b16 %v240
    %v280 = vunpack.c.l.b16 %v241
    %v281 = vunpack.c.l.b16 %v242
    %v282 = vunpack.c.l.b16 %v243
    %v283 = vpack.c.b16 %v268, %v267
    %v284 = vpack.c.b16 %v270, %v269
    %v285 = vpack.c.b16 %v272, %v271
    %v286 = vpack.c.b16 %v274, %v273
    %v287 = vpack.c.b16 %v276, %v275
    %v288 = vpack.c.b16 %v278, %v277
    %v289 = vpack.c.b16 %v280, %v279
    %v290 = vpack.c.b16 %v282, %v281
    %299 = vmatprep.subr.bf16.mxu0 0
    %300 = vmatpush1.bf16.msra.mxu0 %v283
    %301 = vmatprep.subr.bf16.mxu0 0
    %302 = vmatpush1.bf16.msra.mxu0 %v284
    %303 = vmatprep.subr.bf16.mxu0 0
    %304 = vmatpush1.bf16.msra.mxu0 %v285
    %305 = vmatprep.subr.bf16.mxu0 0
    %306 = vmatpush1.bf16.msra.mxu0 %v286
    %307 = vmatprep.subr.bf16.mxu0 0
    %308 = vmatpush1.bf16.msra.mxu0 %v287
    %309 = vmatprep.subr.bf16.mxu0 0
    %310 = vmatpush1.bf16.msra.mxu0 %v288
    %311 = vmatprep.subr.bf16.mxu0 0
    %312 = vmatpush1.bf16.msra.mxu0 %v289
    %313 = vmatprep.subr.bf16.mxu0 0
    %314 = vmatpush1.bf16.msra.mxu0 %v290
    %315 = vmatprep.subr.bf16.mxu0 0
    %316 = vmatpush1.bf16.msra.mxu0 0
    %317 = vmatprep.subr.bf16.mxu0 0
    %318 = vmatpush1.bf16.msra.mxu0 0
    %319 = vmatprep.subr.bf16.mxu0 0
    %320 = vmatpush1.bf16.msra.mxu0 0
    %321 = vmatprep.subr.bf16.mxu0 0
    %322 = vmatpush1.bf16.msra.mxu0 0
    %323 = vmatprep.subr.bf16.mxu0 0
    %324 = vmatpush1.bf16.msra.mxu0 0
    %325 = vmatprep.subr.bf16.mxu0 0
    %326 = vmatpush1.bf16.msra.mxu0 0
    %327 = vmatprep.subr.bf16.mxu0 0
    %328 = vmatpush1.bf16.msra.mxu0 0
    %329 = vmatprep.subr.bf16.mxu0 0
    %330 = vmatpush1.bf16.msra.mxu0 0
    %331 = vmatprep.mubr.bf16.mxu0 0
    %332 = vmatmul.mubr.bf16.gmra.mrb[0].mxu0 %v227
    %v333 = vpop.f32.mrb[0].mxu0
    %v334 = vadd.f32 %v249, %v333
    %v335 = vpop.f32.mrb[0].mxu0
    %v336 = vpop.f32.mrb[0].mxu0
    %v337 = vpop.f32.mrb[0].mxu0
    %338 = vdwg.mxu0
    %v339 = vxor.u32 %v334, 2147483648
    %v340 = vmul.f32 %v339, 1.442695
    %v341 = vpow.pop %v340
    %v342 = vadd.f32 %v341, 1.0
    %v343 = vrcp.pop %v342
    %v344 = vmul.f32 1.0, %v343
    %v345 = vpack.c.bf16 %v344, %v344
    %346 = vst [vmem:[%s7] sm:$0xf] %v345
    // Predicated region
    $region38: #{_policy_forward_impl.1} parent=1 // pred_check
      _
    $region39: #{_policy_forward_impl.1} parent=1 // pred_check_branch
      %348 = sbr.rel (0) target = $region41
    $region40: #{_policy_forward_impl.1} parent=1 // pred_region
      _
    $region41: #{_policy_forward_impl.1} parent=1 // pred_fallthru
      _
    // Predicated region
    $region42: #{_policy_forward_impl.1} parent=1 // pred_check
      _
    $region43: #{_policy_forward_impl.1} parent=1 // pred_check_branch
      %350 = sbr.rel (0) target = $region45
    $region44: #{_policy_forward_impl.1} parent=1 // pred_region
      _
    $region45: #{_policy_forward_impl.1} parent=1 // pred_fallthru
      _
    %351 = vsyncpa [#allocation3], 1
    %352 = vsyncpa [#allocation5], 1

</llo_original>
